<compile_context>
chip_gen: v7x
topology: tpu7x:2x2x1
jax: 0.10.0
libtpu: 0.0.40
codegen_flags: <defaults>
</compile_context>

<pallas_src>
import functools

import jax
import jax.numpy as jnp
from jax.experimental import pallas as pl
from jax.experimental.pallas import tpu as pltpu


def _cdiv(a, b):
    return -(-a // b)


def _tree_group_sum(x, d):
    """Sliding-window sums of width `d` (power of two) along the lane axis.

    After the roll tree, lane j holds sum_{k=0..d-1} x[..., j-k]. For lanes
    j = g*d + (d-1) this is exactly the sum over contiguous group g
    (lanes g*d .. g*d + d - 1); other lanes cross group boundaries and must be
    masked by the caller.
    """
    s = x
    k = 1
    while k < d:
        s = s + pltpu.roll(s, shift=k, axis=1)
        k *= 2
    return s


def _kld_kernel(xs_ref, xt_ref, out_ref, *, d, folded, inv_tau):
    step = pl.program_id(1)

    @pl.when(step == 0)
    def _init():
        out_ref[...] = jnp.zeros_like(out_ref)

    s = xs_ref[...].astype(jnp.float32) * inv_tau
    t = xt_ref[...].astype(jnp.float32) * inv_tau

    # Numerical-stability shift (softmax is shift invariant).
    c_s = jnp.max(s, axis=-1, keepdims=True)
    c_t = jnp.max(t, axis=-1, keepdims=True)

    e_s = jnp.exp(s - c_s)
    e_t = jnp.exp(t - c_t)
    w = e_t * (t - s)

    if folded:
        denom_s = _tree_group_sum(e_s, d)
        denom_t = _tree_group_sum(e_t, d)
        numer = _tree_group_sum(w, d)
    else:
        denom_s = jnp.sum(e_s, axis=-1, keepdims=True)
        denom_t = jnp.sum(e_t, axis=-1, keepdims=True)
        numer = jnp.sum(w, axis=-1, keepdims=True)

    # Per-row KL contribution:
    #   sum_j p_j (log p_j - log q_j)
    #     = (c_s - c_t) + log(denom_s / denom_t) + numer / denom_t
    # (exact division / log kept for accuracy of the large reduction).
    r_t = 1.0 / denom_t
    contrib = (c_s - c_t) + jnp.log(denom_s * r_t) + numer * r_t

    if folded:
        # Only lanes j with j % d == d - 1 hold valid per-row group sums.
        lane = jax.lax.broadcasted_iota(jnp.int32, contrib.shape, 1)
        contrib = jnp.where(lane % d == d - 1, contrib, 0.0)

    out_ref[...] += contrib[None]


def kld_loss(x_student, x_teacher, *, alpha=1.0, tau=1.0):
    assert x_student.shape == x_teacher.shape
    shape = x_student.shape
    d = shape[-1]
    num_rows = 1
    for dim in shape[:-1]:
        num_rows *= dim
    batch = shape[0]

    scale = float(alpha) / (float(batch) * float(num_rows))
    inv_tau = 1.0 / float(tau)

    xs = x_student.reshape(num_rows, d)
    xt = x_teacher.reshape(num_rows, d)

    # Fold rows into the 128-lane axis when the softmax width divides 128.
    folded = (d < 128) and (128 % d == 0)
    g = 128 // d if folded else 1
    lane_w = g * d

    n_par = 2                      # parallel outer chunks (2 TensorCores on v7x)
    target_block_bytes = 1 << 20   # ~1 MiB per input buffer
    itemsize = xs.dtype.itemsize

    nf = _cdiv(num_rows, g)        # number of folded rows
    tb = target_block_bytes // (lane_w * itemsize)
    tb = max(8, min(tb, 2048, _cdiv(nf, n_par)))
    tb = max(8, (tb // 8) * 8)     # keep sublane-aligned row blocks

    nf_pad = _cdiv(nf, tb * n_par) * (tb * n_par)
    rows_pad = nf_pad * g
    if rows_pad != num_rows:
        # Zero rows: student == teacher softmax -> KL contribution is 0.
        xs = jnp.pad(xs, ((0, rows_pad - num_rows), (0, 0)))
        xt = jnp.pad(xt, ((0, rows_pad - num_rows), (0, 0)))
    xs = xs.reshape(nf_pad, lane_w)
    xt = xt.reshape(nf_pad, lane_w)

    steps = nf_pad // (tb * n_par)

    kernel = functools.partial(_kld_kernel, d=d, folded=folded, inv_tau=inv_tau)
    block_map = lambda pi, si: (pi * steps + si, 0)

    partials = pl.pallas_call(
        kernel,
        out_shape=jax.ShapeDtypeStruct((n_par, tb, lane_w), jnp.float32),
        grid_spec=pltpu.PrefetchScalarGridSpec(
            num_scalar_prefetch=0,
            grid=(n_par, steps),
            in_specs=[
                pl.BlockSpec((tb, lane_w), block_map),
                pl.BlockSpec((tb, lane_w), block_map),
            ],
            out_specs=pl.BlockSpec((1, tb, lane_w), lambda pi, si: (pi, 0, 0)),
        ),
        compiler_params=pltpu.CompilerParams(
            dimension_semantics=("parallel", "arbitrary"),
            vmem_limit_bytes=32 * 1024 * 1024,
        ),
    )(xs, xt)

    return jnp.sum(partials) * scale


def _reference_kld(x_student, x_teacher, *, alpha=1.0, tau=1.0):
    # Pure-JAX reference for sanity checking.
    q = jax.nn.log_softmax(x_student / tau, axis=-1)
    p = jax.nn.softmax(x_teacher / tau, axis=-1)
    logp = jax.nn.log_softmax(x_teacher / tau, axis=-1)
    kl_sum = jnp.sum(p * (logp - q))
    batch = x_student.shape[0]
    num_rows = x_student.size // x_student.shape[-1]
    return alpha * kl_sum / (batch * num_rows)


if __name__ == "__main__":
    key = jax.random.PRNGKey(0)
    k1, k2, k3, k4 = jax.random.split(key, 4)

    # NCHW-like logits (batch=2, channels=4, spatial=16x16); softmax over W.
    xs1 = jax.random.normal(k1, (2, 4, 16, 16), dtype=jnp.float32)
    xt1 = jax.random.normal(k2, (2, 4, 16, 16), dtype=jnp.float32)
    out1 = jax.block_until_ready(kld_loss(xs1, xt1, alpha=1.0, tau=1.0))
    ref1 = _reference_kld(xs1, xt1, alpha=1.0, tau=1.0)
    assert jnp.allclose(out1, ref1, rtol=2e-5, atol=1e-6), (out1, ref1)

    # Row count not divisible by the fold factor (exercises zero-padding),
    # plus non-default alpha / tau.
    xs2 = 3.0 * jax.random.normal(k3, (2, 3, 5, 16), dtype=jnp.float32)
    xt2 = 3.0 * jax.random.normal(k4, (2, 3, 5, 16), dtype=jnp.float32)
    out2 = jax.block_until_ready(kld_loss(xs2, xt2, alpha=0.5, tau=2.0))
    ref2 = _reference_kld(xs2, xt2, alpha=0.5, tau=2.0)
    assert jnp.allclose(out2, ref2, rtol=2e-5, atol=1e-6), (out2, ref2)

    print("KERNEL_OK")
</pallas_src>

<mosaic_0001>
module attributes {stable_mosaic.version = 11 : i64} {
  func.func @_kld_kernel(%arg0: i32, %arg1: i32, %arg2: memref<8x128xf32, #tpu.memory_space<vmem>>, %arg3: memref<8x128xf32, #tpu.memory_space<vmem>>, %arg4: memref<1x8x128xf32, #tpu.memory_space<vmem>>) attributes {dimension_semantics = [#tpu.dimension_semantics<parallel>, #tpu.dimension_semantics<arbitrary>], iteration_bounds = array<i64: 2, 1>, scalar_prefetch = 0 : i64, scratch_operands = 0 : i64, tpu.core_type = #tpu.core_type<tc>, window_params = [{transform_indices = @transform_0, window_bounds = array<i64: 8, 128>}, {transform_indices = @transform_1, window_bounds = array<i64: 8, 128>}, {transform_indices = @transform_2, window_bounds = array<i64: 1, 8, 128>}]} {
    %c0_i32 = arith.constant 0 : i32
    %0 = arith.cmpi eq, %arg1, %c0_i32 : i32
    %1 = arith.extui %0 : i1 to i32
    %c0_i32_0 = arith.constant 0 : i32
    %2 = arith.cmpi ne, %1, %c0_i32_0 : i32
    scf.if %2 {
      %cst_28 = arith.constant 0.000000e+00 : f32
      %79 = vector.broadcast %cst_28 : f32 to vector<1x8x128xf32>
      %c0_29 = arith.constant 0 : index
      %c0_30 = arith.constant 0 : index
      %c0_31 = arith.constant 0 : index
      %80 = vector.load %arg4[%c0_29, %c0_30, %c0_31] : memref<1x8x128xf32, #tpu.memory_space<vmem>>, vector<1x8x128xf32>
      tpu.vector_store %arg4[%c0_29, %c0_30, %c0_31], %79 {strides = array<i32>} : memref<1x8x128xf32, #tpu.memory_space<vmem>>, vector<1x8x128xf32>,
    } else {
    }
    %c0 = arith.constant 0 : index
    %c0_1 = arith.constant 0 : index
    %3 = vector.load %arg2[%c0, %c0_1] : memref<8x128xf32, #tpu.memory_space<vmem>>, vector<8x128xf32>
    %cst = arith.constant 1.000000e+00 : f32
    %4 = vector.broadcast %cst : f32 to vector<8x128xf32>
    %5 = arith.mulf %3, %4 : vector<8x128xf32>
    %c0_2 = arith.constant 0 : index
    %c0_3 = arith.constant 0 : index
    %6 = vector.load %arg3[%c0_2, %c0_3] : memref<8x128xf32, #tpu.memory_space<vmem>>, vector<8x128xf32>
    %cst_4 = arith.constant 1.000000e+00 : f32
    %7 = vector.broadcast %cst_4 : f32 to vector<8x128xf32>
    %8 = arith.mulf %6, %7 : vector<8x128xf32>
    %cst_5 = arith.constant dense<0xFF800000> : vector<8xf32>
    %9 = vector.multi_reduction <maximumf>, %5, %cst_5 [1] : vector<8x128xf32> to vector<8xf32>
    %10 = vector.shape_cast %9 : vector<8xf32> to vector<8x1xf32>
    %cst_6 = arith.constant dense<0xFF800000> : vector<8xf32>
    %11 = vector.multi_reduction <maximumf>, %8, %cst_6 [1] : vector<8x128xf32> to vector<8xf32>
    %12 = vector.shape_cast %11 : vector<8xf32> to vector<8x1xf32>
    %13 = vector.broadcast %10 : vector<8x1xf32> to vector<8x128xf32>
    %14 = arith.subf %5, %13 : vector<8x128xf32>
    %15 = math.exp %14 : vector<8x128xf32>
    %16 = vector.broadcast %12 : vector<8x1xf32> to vector<8x128xf32>
    %17 = arith.subf %8, %16 : vector<8x128xf32>
    %18 = math.exp %17 : vector<8x128xf32>
    %19 = arith.subf %8, %5 : vector<8x128xf32>
    %20 = arith.mulf %18, %19 : vector<8x128xf32>
    %c1_i32 = arith.constant 1 : i32
    %21 = tpu.dynamic_rotate %15 by %c1_i32 dim 1 : vector<8x128xf32>, i32 -> vector<8x128xf32>
    %22 = arith.addf %15, %21 : vector<8x128xf32>
    %c2_i32 = arith.constant 2 : i32
    %23 = tpu.dynamic_rotate %22 by %c2_i32 dim 1 : vector<8x128xf32>, i32 -> vector<8x128xf32>
    %24 = arith.addf %22, %23 : vector<8x128xf32>
    %c4_i32 = arith.constant 4 : i32
    %25 = tpu.dynamic_rotate %24 by %c4_i32 dim 1 : vector<8x128xf32>, i32 -> vector<8x128xf32>
    %26 = arith.addf %24, %25 : vector<8x128xf32>
    %c8_i32 = arith.constant 8 : i32
    %27 = tpu.dynamic_rotate %26 by %c8_i32 dim 1 : vector<8x128xf32>, i32 -> vector<8x128xf32>
    %28 = arith.addf %26, %27 : vector<8x128xf32>
    %c1_i32_7 = arith.constant 1 : i32
    %29 = tpu.dynamic_rotate %18 by %c1_i32_7 dim 1 : vector<8x128xf32>, i32 -> vector<8x128xf32>
    %30 = arith.addf %18, %29 : vector<8x128xf32>
    %c2_i32_8 = arith.constant 2 : i32
    %31 = tpu.dynamic_rotate %30 by %c2_i32_8 dim 1 : vector<8x128xf32>, i32 -> vector<8x128xf32>
    %32 = arith.addf %30, %31 : vector<8x128xf32>
    %c4_i32_9 = arith.constant 4 : i32
    %33 = tpu.dynamic_rotate %32 by %c4_i32_9 dim 1 : vector<8x128xf32>, i32 -> vector<8x128xf32>
    %34 = arith.addf %32, %33 : vector<8x128xf32>
    %c8_i32_10 = arith.constant 8 : i32
    %35 = tpu.dynamic_rotate %34 by %c8_i32_10 dim 1 : vector<8x128xf32>, i32 -> vector<8x128xf32>
    %36 = arith.addf %34, %35 : vector<8x128xf32>
    %c1_i32_11 = arith.constant 1 : i32
    %37 = tpu.dynamic_rotate %20 by %c1_i32_11 dim 1 : vector<8x128xf32>, i32 -> vector<8x128xf32>
    %38 = arith.addf %20, %37 : vector<8x128xf32>
    %c2_i32_12 = arith.constant 2 : i32
    %39 = tpu.dynamic_rotate %38 by %c2_i32_12 dim 1 : vector<8x128xf32>, i32 -> vector<8x128xf32>
    %40 = arith.addf %38, %39 : vector<8x128xf32>
    %c4_i32_13 = arith.constant 4 : i32
    %41 = tpu.dynamic_rotate %40 by %c4_i32_13 dim 1 : vector<8x128xf32>, i32 -> vector<8x128xf32>
    %42 = arith.addf %40, %41 : vector<8x128xf32>
    %c8_i32_14 = arith.constant 8 : i32
    %43 = tpu.dynamic_rotate %42 by %c8_i32_14 dim 1 : vector<8x128xf32>, i32 -> vector<8x128xf32>
    %44 = arith.addf %42, %43 : vector<8x128xf32>
    %cst_15 = arith.constant 1.000000e+00 : f32
    %45 = vector.broadcast %cst_15 : f32 to vector<8x128xf32>
    %46 = arith.divf %45, %36 : vector<8x128xf32>
    %47 = arith.subf %10, %12 : vector<8x1xf32>
    %48 = arith.mulf %28, %46 : vector<8x128xf32>
    %49 = math.log %48 : vector<8x128xf32>
    %50 = vector.broadcast %47 : vector<8x1xf32> to vector<8x128xf32>
    %51 = arith.addf %50, %49 : vector<8x128xf32>
    %52 = arith.mulf %44, %46 : vector<8x128xf32>
    %53 = arith.addf %51, %52 : vector<8x128xf32>
    %54 = tpu.iota {dimensions = array<i32: 1>} : vector<8x128xi32>
    %c16_i32 = arith.constant 16 : i32
    %c0_i32_16 = arith.constant 0 : i32
    %55 = arith.cmpi eq, %c16_i32, %c0_i32_16 : i32
    %c1_i32_17 = arith.constant 1 : i32
    %56 = arith.select %55, %c1_i32_17, %c16_i32 : i32
    %57 = vector.broadcast %56 : i32 to vector<8x128xi32>
    %58 = arith.remsi %54, %57 : vector<8x128xi32>
    %c0_i32_18 = arith.constant 0 : i32
    %59 = vector.broadcast %c0_i32_18 : i32 to vector<8x128xi32>
    %60 = arith.cmpi ne, %58, %59 : vector<8x128xi32>
    %c0_i32_19 = arith.constant 0 : i32
    %61 = vector.broadcast %c0_i32_19 : i32 to vector<8x128xi32>
    %62 = arith.cmpi slt, %58, %61 : vector<8x128xi32>
    %c0_i32_20 = arith.constant 0 : i32
    %63 = arith.cmpi slt, %56, %c0_i32_20 : i32
    %64 = vector.broadcast %63 : i1 to vector<8x128xi1>
    %65 = vector.broadcast %64 : vector<8x128xi1> to vector<8x128xi1>
    %66 = arith.xori %62, %65 : vector<8x128xi1>
    %67 = arith.andi %66, %60 : vector<8x128xi1>
    %68 = vector.broadcast %56 : i32 to vector<8x128xi32>
    %69 = arith.addi %58, %68 : vector<8x128xi32>
    %70 = arith.select %67, %69, %58 : vector<8x128xi1>, vector<8x128xi32>
    %c15_i32 = arith.constant 15 : i32
    %71 = vector.broadcast %c15_i32 : i32 to vector<8x128xi32>
    %72 = arith.cmpi eq, %70, %71 : vector<8x128xi32>
    %cst_21 = arith.constant 0.000000e+00 : f32
    %73 = vector.broadcast %cst_21 : f32 to vector<8x128xf32>
    %74 = arith.select %72, %53, %73 : vector<8x128xi1>, vector<8x128xf32>
    %c0_22 = arith.constant 0 : index
    %c0_23 = arith.constant 0 : index
    %c0_24 = arith.constant 0 : index
    %75 = vector.load %arg4[%c0_22, %c0_23, %c0_24] : memref<1x8x128xf32, #tpu.memory_space<vmem>>, vector<1x8x128xf32>
    %76 = vector.shape_cast %74 : vector<8x128xf32> to vector<1x8x128xf32>
    %77 = arith.addf %75, %76 : vector<1x8x128xf32>
    %c0_25 = arith.constant 0 : index
    %c0_26 = arith.constant 0 : index
    %c0_27 = arith.constant 0 : index
    %78 = vector.load %arg4[%c0_25, %c0_26, %c0_27] : memref<1x8x128xf32, #tpu.memory_space<vmem>>, vector<1x8x128xf32>
    tpu.vector_store %arg4[%c0_25, %c0_26, %c0_27], %77 {strides = array<i32>} : memref<1x8x128xf32, #tpu.memory_space<vmem>>, vector<1x8x128xf32>,
    return
  }
  func.func @transform_0(%arg0: i32, %arg1: i32) -> (i32, i32) {
    %c1_i32 = arith.constant 1 : i32
    %0 = arith.muli %arg0, %c1_i32 : i32
    %1 = arith.addi %0, %arg1 : i32
    %c0_i32 = arith.constant 0 : i32
    %c0_i32_0 = arith.constant 0 : i32
    return %1, %c0_i32 : i32, i32
  }
  func.func @transform_1(%arg0: i32, %arg1: i32) -> (i32, i32) {
    %c1_i32 = arith.constant 1 : i32
    %0 = arith.muli %arg0, %c1_i32 : i32
    %1 = arith.addi %0, %arg1 : i32
    %c0_i32 = arith.constant 0 : i32
    %c0_i32_0 = arith.constant 0 : i32
    return %1, %c0_i32 : i32, i32
  }
  func.func @transform_2(%arg0: i32, %arg1: i32) -> (i32, i32, i32) {
    %c0_i32 = arith.constant 0 : i32
    %c0_i32_0 = arith.constant 0 : i32
    %c0_i32_1 = arith.constant 0 : i32
    return %arg0, %c0_i32, %c0_i32_0 : i32, i32, i32
  }
}

</mosaic_0001>

<llo_original>
// kernel: tpu_custom_call.1
$region0: #{tpu_custom_call.1}
  #allocation0 [shape = 'u32[]', space=smem, size = 0x4, offset = 0x4, fixed_abs, tag = 'smem constant byte address 0x4 - core index']
  #allocation1 [shape = 'u32[144,128]{1,0:T(1,128)}', space=vmem, size = 0x12000, scoped, tag = 'internal scratch']
  %s0 = inlined_call_operand.hbm [shape: f32[16,128], index: 0, kind: input, shape index: {}]
  %s1 = inlined_call_operand.hbm [shape: f32[16,128], index: 1, kind: input, shape index: {}]
  %s2 = inlined_call_operand.hbm [shape: f32[2,8,128], index: 2, kind: output, shape index: {}]
  %s3 = sld [smem:[#allocation0]]
  $region53: #{tpu_custom_call.1} parent=0
    _
  %s5 = ssub.s32 1, %s3
  %s6 = scalar_select 0, %s5, %s3
  $region1: #{tpu_custom_call.1} parent=0
    #allocation2 [shape = 'u8[8192]{0}', space=vmem, size = 0x2000, scoped, tag = 'input window, operand 0']
    #allocation3 [shape = 's32[2]{0}', space=sflag, size = 0x8, scoped, tag = 'scoped memory for tpu_custom_call.1']
    #allocation4 [shape = 's32[2]{0}', space=sflag, size = 0x8, scoped, tag = 'scoped memory for tpu_custom_call.1']
    #allocation5 [shape = 'u8[8192]{0}', space=vmem, size = 0x2000, scoped, tag = 'input window, operand 1']
    #allocation6 [shape = 's32[2]{0}', space=sflag, size = 0x8, scoped, tag = 'scoped memory for tpu_custom_call.1']
    #allocation7 [shape = 'u8[8192]{0}', space=vmem, size = 0x2000, scoped, tag = 'output window, operand 0']
    %7 = vsyncpa [#allocation3], 0
    %s8 = scalar_lea.sflag [#allocation3], 1
    %9 = vsyncpa %s8, 0
    %10 = vsyncpa [#allocation6], 0
    %s11 = scalar_lea.sflag [#allocation6], 1
    %12 = vsyncpa %s11, 0
    %13 = vsyncpa [#allocation4], 0
    %s14 = scalar_lea.sflag [#allocation4], 1
    %15 = vsyncpa %s14, 0
    loop: start=0, step=1, limit=4
    $region2: #{tpu_custom_call.1} parent=1 // loop_pre_header
      _
    $region3: #{tpu_custom_call.1} parent=1 // loop_header
      %s17 = sphi 0, %s21
      %p18 = scmp.ge.s32.totalorder %s17, 4
      %s24 = sphi 0, %s36
      %s25 = sphi 0, %s32
      %s26 = sphi 0, %s24
      %s27 = sphi 0, %s25
      %s28 = sphi 0, %s26
      %s29 = sphi 0, %s27
      %s41 = sphi 0, %s43
      %s44 = sphi 0, %s41
      %s45 = sphi 0, %s44
      %s61 = sphi 0, %s45
      %s69 = sphi 0, %s71
      %s72 = sphi 0, %s69
      %s73 = sphi 0, %s72
      %s89 = sphi 0, %s73
      %s95 = sphi 0, %s97
      %s98 = sphi 0, %s95
      %s99 = sphi 0, %s98
      %s115 = sphi 0, %s99
    $region4: #{tpu_custom_call.1} parent=1 // loop_header_branch
      %20 = sbr.rel (%p18) target = $region8
    $region5: #{tpu_custom_call.1} parent=1 // loop_body
      %s22 = ssub.s32 %s17, 1
      %s23 = ssub.s32 %s17, 2
      %s30 = sadd.s32 1, %s25
      %p31 = scmp.ge.s32.totalorder %s30, 1
      %s32 = scalar_select %p31, 0, %s30
      %s33 = sadd.s32 1, %s24
      %s34 = scalar_select %p31, %s33, %s24
      %p35 = scmp.ge.s32.totalorder %s34, 2
      %s36 = scalar_select %p35, 0, %s34
      %s37 = sadd.s32 %s24, %s25
      %s38 = sadd.s32 %s36, %s32
      %s39 = ssub.s32 %s37, %s38
      %p40 = scmp.eq.s32.totalorder %s39, 0
      %s42 = sadd.s32 %s41, 1
      %s43 = scalar_select %p40, %s41, %s42
      %p46 = pneg %p40
      %p47 = scmp.eq.s32.totalorder %s17, 1
      %p48 = por %p46, %p47
      %p49 = scmp.ne.s32.totalorder %s41, %s44
      %p50 = scmp.eq.s32.totalorder %s17, 0
      %p51 = por %p49, %p50
      %p52 = scmp.ne.s32.totalorder %s41, %s44
      %p53 = scmp.eq.s32.totalorder %s22, 1
      %p54 = por %p52, %p53
      %p55 = scmp.ne.s32.totalorder %s44, %s45
      %p56 = scmp.eq.s32.totalorder %s22, 0
      %p57 = por %p55, %p56
      %p58 = scmp.ne.s32.totalorder %s44, %s45
      %p59 = scmp.eq.s32.totalorder %s23, 1
      %p60 = por %p58, %p59
      %p62 = scmp.ne.s32.totalorder %s45, %s61
      %p63 = scmp.eq.s32.totalorder %s23, 0
      %p64 = por %p62, %p63
      %s65 = sadd.s32 %s24, %s25
      %s66 = sadd.s32 %s36, %s32
      %s67 = ssub.s32 %s65, %s66
      %p68 = scmp.eq.s32.totalorder %s67, 0
      %s70 = sadd.s32 %s69, 1
      %s71 = scalar_select %p68, %s69, %s70
      %p74 = pneg %p68
      %p75 = scmp.eq.s32.totalorder %s17, 1
      %p76 = por %p74, %p75
      %p77 = scmp.ne.s32.totalorder %s69, %s72
      %p78 = scmp.eq.s32.totalorder %s17, 0
      %p79 = por %p77, %p78
      %p80 = scmp.ne.s32.totalorder %s69, %s72
      %p81 = scmp.eq.s32.totalorder %s22, 1
      %p82 = por %p80, %p81
      %p83 = scmp.ne.s32.totalorder %s72, %s73
      %p84 = scmp.eq.s32.totalorder %s22, 0
      %p85 = por %p83, %p84
      %p86 = scmp.ne.s32.totalorder %s72, %s73
      %p87 = scmp.eq.s32.totalorder %s23, 1
      %p88 = por %p86, %p87
      %p90 = scmp.ne.s32.totalorder %s73, %s89
      %p91 = scmp.eq.s32.totalorder %s23, 0
      %p92 = por %p90, %p91
      %s93 = ssub.s32 %s24, %s36
      %p94 = scmp.eq.s32.totalorder %s93, 0
      %s96 = sadd.s32 %s95, 1
      %s97 = scalar_select %p94, %s95, %s96
      %p100 = pneg %p94
      %p101 = scmp.eq.s32.totalorder %s17, 1
      %p102 = por %p100, %p101
      %p103 = scmp.ne.s32.totalorder %s95, %s98
      %p104 = scmp.eq.s32.totalorder %s17, 0
      %p105 = por %p103, %p104
      %p106 = scmp.ne.s32.totalorder %s95, %s98
      %p107 = scmp.eq.s32.totalorder %s22, 1
      %p108 = por %p106, %p107
      %p109 = scmp.ne.s32.totalorder %s98, %s99
      %p110 = scmp.eq.s32.totalorder %s22, 0
      %p111 = por %p109, %p110
      %p112 = scmp.ne.s32.totalorder %s98, %s99
      %p113 = scmp.eq.s32.totalorder %s23, 1
      %p114 = por %p112, %p113
      %p116 = scmp.ne.s32.totalorder %s99, %s115
      %p117 = scmp.eq.s32.totalorder %s23, 0
      %p118 = por %p116, %p117
      %p119 = scmp.le.s32.totalorder 1, %s17
      %p120 = scmp.lt.s32.totalorder %s17, 3
      %p121 = pnand %p119, %p120
      %p122 = pneg %p121
      // Predicated region
      $region9: #{tpu_custom_call.1} parent=5 // pred_check
        _
      $region10: #{tpu_custom_call.1} parent=5 // pred_check_branch
        %124 = sbr.rel (%p121) target = $region12
      $region11: #{tpu_custom_call.1} parent=5 // pred_region
        %s125 = ssub.s32 %s17, 1
      $region12: #{tpu_custom_call.1} parent=5 // pred_fallthru
        _
      %p126 = scmp.lt.s32.totalorder %s17, 2
      // Predicated region
      $region13: #{tpu_custom_call.1} parent=5 // pred_check
        %p127 = pneg %p126
      $region14: #{tpu_custom_call.1} parent=5 // pred_check_branch
        %129 = sbr.rel (%p127) target = $region16
      $region15: #{tpu_custom_call.1} parent=5 // pred_region
        // Predicated region
        $region17: #{tpu_custom_call.1} parent=15 // pred_check
          %p130 = pneg %p51
        $region18: #{tpu_custom_call.1} parent=15 // pred_check_branch
          %132 = sbr.rel (%p130) target = $region20
        $region19: #{tpu_custom_call.1} parent=15 // pred_region
          %s133 = sand.u32 %s41, 1
          %s134 = scalar_lea.sflag [#allocation3], %s133
          %s135 = sand.u32 %s41, 1
          %s136 = smul.addr %s135, 8
          %s137 = scalar_lea.vmem [#allocation2], %s136
          %s138 = sadd.s32 %s24, %s25
          %s140 = ssub.s32 128, 128
          %141 = vsyncadd %s134, %s140
          %s142 = smul.addr %s138, 128
          %s143 = scalar_lea.hbm %s0, %s142
          %s145 = sshll.u32 %s137, 4
          %s146 = int_to_ptr.vmem [resolvable:$true] %s145
          %148 = dma.hbm_to_vmem [thread:$0]  %s143, 128, %s146, %s134
        $region20: #{tpu_custom_call.1} parent=15 // pred_fallthru
          _
        // Predicated region
        $region21: #{tpu_custom_call.1} parent=15 // pred_check
          %p149 = pneg %p79
        $region22: #{tpu_custom_call.1} parent=15 // pred_check_branch
          %151 = sbr.rel (%p149) target = $region24
        $region23: #{tpu_custom_call.1} parent=15 // pred_region
          %s152 = sand.u32 %s69, 1
          %s153 = scalar_lea.sflag [#allocation6], %s152
          %s154 = sand.u32 %s69, 1
          %s155 = smul.addr %s154, 8
          %s156 = scalar_lea.vmem [#allocation5], %s155
          %s157 = sadd.s32 %s24, %s25
          %s159 = ssub.s32 128, 128
          %160 = vsyncadd %s153, %s159
          %s161 = smul.addr %s157, 128
          %s162 = scalar_lea.hbm %s1, %s161
          %s164 = sshll.u32 %s156, 4
          %s165 = int_to_ptr.vmem [resolvable:$true] %s164
          %167 = dma.hbm_to_vmem [thread:$0]  %s162, 128, %s165, %s153
        $region24: #{tpu_custom_call.1} parent=15 // pred_fallthru
          _
      $region16: #{tpu_custom_call.1} parent=5 // pred_fallthru
        _
      %p168 = scmp.le.s32.totalorder 1, %s17
      %p169 = scmp.lt.s32.totalorder %s17, 3
      %p170 = pnand %p168, %p169
      %p171 = pneg %p170
      // Predicated region
      $region25: #{tpu_custom_call.1} parent=5 // pred_check
        _
      $region26: #{tpu_custom_call.1} parent=5 // pred_check_branch
        %173 = sbr.rel (%p170) target = $region28
      $region27: #{tpu_custom_call.1} parent=5 // pred_region
        %s174 = ssub.s32 %s17, 1
        %s175 = sand.u32 %s44, 1
        %s176 = scalar_lea.sflag [#allocation3], %s175
        %s177 = sand.u32 %s44, 1
        %s178 = smul.addr %s177, 8
        %s179 = scalar_lea.vmem [#allocation2], %s178
        // Predicated region
        $region29: #{tpu_custom_call.1} parent=27 // pred_check
          %p180 = pneg %p57
        $region30: #{tpu_custom_call.1} parent=27 // pred_check_branch
          %182 = sbr.rel (%p180) target = $region32
        $region31: #{tpu_custom_call.1} parent=27 // pred_region
          %183 = dma.done %s176, 128
        $region32: #{tpu_custom_call.1} parent=27 // pred_fallthru
          _
        %s184 = sand.u32 %s72, 1
        %s185 = scalar_lea.sflag [#allocation6], %s184
        %s186 = sand.u32 %s72, 1
        %s187 = smul.addr %s186, 8
        %s188 = scalar_lea.vmem [#allocation5], %s187
        // Predicated region
        $region33: #{tpu_custom_call.1} parent=27 // pred_check
          %p189 = pneg %p85
        $region34: #{tpu_custom_call.1} parent=27 // pred_check_branch
          %191 = sbr.rel (%p189) target = $region36
        $region35: #{tpu_custom_call.1} parent=27 // pred_region
          %192 = dma.done %s185, 128
        $region36: #{tpu_custom_call.1} parent=27 // pred_fallthru
          _
        %s193 = sand.u32 %s44, 1
        %s194 = scalar_lea.sflag [#allocation3], %s193
        %s195 = sand.u32 %s44, 1
        %s196 = smul.addr %s195, 8
        %s197 = scalar_lea.vmem [#allocation2], %s196
        %p198 = pneg %p57
        %p199 = pneg %p54
        %s200 = sand.u32 %s72, 1
        %s201 = scalar_lea.sflag [#allocation6], %s200
        %s202 = sand.u32 %s72, 1
        %s203 = smul.addr %s202, 8
        %s204 = scalar_lea.vmem [#allocation5], %s203
        %p205 = pneg %p85
        %p206 = pneg %p82
        %p207 = pneg %p111
        %p208 = pneg %p108
        %s209 = sand.u32 %s98, 1
        %s210 = scalar_lea.sflag [#allocation4], %s209
        %s211 = sand.u32 %s98, 1
        %s212 = smul.addr %s211, 8
        %s213 = scalar_lea.vmem [#allocation7], %s212
        %s214 = sadd.s32 %s26, %s27
        %s215 = sadd.s32 %s26, %s27
        %p216 = scmp.eq.s32.totalorder %s27, 0
        // Predicated region
        $region37: #{tpu_custom_call.1} parent=27 // pred_check
          %p217 = pneg %p216
        $region38: #{tpu_custom_call.1} parent=27 // pred_check_branch
          %219 = sbr.rel (%p217) target = $region40
        $region39: #{tpu_custom_call.1} parent=27 // pred_region
          %220 = vst [vmem:[%s213] sm:$0xff] 0.0
        $region40: #{tpu_custom_call.1} parent=27 // pred_fallthru
          _
        %v221 = vld [vmem:[%s179] sm:$0xff]
        %v222 = vld [vmem:[%s188] sm:$0xff]
        %223 = vmax.xlane.f32.xlu0 %v221
        %v224 = vpop.xlane.xlu0 %223
        %225 = vmax.xlane.f32.xlu0 %v222
        %v226 = vpop.xlane.xlu0 %225
        %v227 = vsub.f32 %v221, %v224
        %v228 = vmul.f32 %v227, 1.442695
        %v229 = vpow.pop %v228
        %v230 = vsub.f32 %v222, %v226
        %v231 = vmul.f32 %v230, 1.442695
        %v232 = vpow.pop %v231
        %v233 = vsub.f32 %v222, %v221
        %v234 = vmul.f32 %v232, %v233
        %235 = vrot.lane.b32.xlu0 %v229, 1
        %v236 = vpop.permute.xlu0 %235
        %v237 = vadd.f32 %v229, %v236
        %238 = vrot.lane.b32.xlu0 %v237, 2
        %v239 = vpop.permute.xlu0 %238
        %v240 = vadd.f32 %v237, %v239
        %241 = vrot.lane.b32.xlu0 %v240, 4
        %v242 = vpop.permute.xlu0 %241
        %v243 = vadd.f32 %v240, %v242
        %244 = vrot.lane.b32.xlu0 %v243, 8
        %v245 = vpop.permute.xlu0 %244
        %v246 = vadd.f32 %v243, %v245
        %247 = vrot.lane.b32.xlu0 %v232, 1
        %v248 = vpop.permute.xlu0 %247
        %v249 = vadd.f32 %v232, %v248
        %250 = vrot.lane.b32.xlu0 %v249, 2
        %v251 = vpop.permute.xlu0 %250
        %v252 = vadd.f32 %v249, %v251
        %253 = vrot.lane.b32.xlu0 %v252, 4
        %v254 = vpop.permute.xlu0 %253
        %v255 = vadd.f32 %v252, %v254
        %256 = vrot.lane.b32.xlu0 %v255, 8
        %v257 = vpop.permute.xlu0 %256
        %v258 = vadd.f32 %v255, %v257
        %259 = vrot.lane.b32.xlu0 %v234, 1
        %v260 = vpop.permute.xlu0 %259
        %v261 = vadd.f32 %v234, %v260
        %262 = vrot.lane.b32.xlu0 %v261, 2
        %v263 = vpop.permute.xlu0 %262
        %v264 = vadd.f32 %v261, %v263
        %265 = vrot.lane.b32.xlu0 %v264, 4
        %v266 = vpop.permute.xlu0 %265
        %v267 = vadd.f32 %v264, %v266
        %268 = vrot.lane.b32.xlu0 %v267, 8
        %v269 = vpop.permute.xlu0 %268
        %v270 = vadd.f32 %v267, %v269
        %v271 = vrcp.pop %v258
        %v272 = vmul.f32 1.0, %v271
        %v273 = vsub.f32 %v224, %v226
        %v274 = vmul.f32 %v246, %v272
        %v275 = vlog2.pop %v274
        %v276 = vmul.f32 %v275, 0.6931472
        %v277 = vadd.f32 %v273, %v276
        %v278 = vmul.f32 %v270, %v272
        %v279 = vadd.f32 %v277, %v278
        %v280 = vlaneseq
        %v281 = vand.u32 %v280, 127
        %vm282 = vcmp.lt.s32.totalorder %v281, 0
        %v283 = vsub.s32 0, %v281
        %v284 = vsel %vm282, %v283, %v281
        %v285 = vshrl.u32 %v284, 4
        %v286 = vand.u32 %v284, 15
        %v287 = vsub.s32 0, %v286
        %v288 = vsel %vm282, %v287, %v286
        %vm289 = vcmp.ne.s32.totalorder %v288, 0
        %vm290 = vcmp.lt.s32.totalorder %v288, 0
        %vm291 = vmand %vm290, %vm289
        %v292 = vadd.s32 %v288, 16
        %v293 = vsel %vm291, %v292, %v288
        %vm294 = vcmp.eq.s32.totalorder %v293, 15
        %v295 = vsel %vm294, %v279, 0.0
        %v296 = vld [vmem:[%s213] sm:$0xff]
        %v297 = vadd.f32 %v296, %v295
        %298 = vst [vmem:[%s213] sm:$0xff] %v297
        %s299 = sand.u32 %s98, 1
        %s300 = scalar_lea.sflag [#allocation4], %s299
        %s301 = sand.u32 %s98, 1
        %s302 = smul.addr %s301, 8
        %s303 = scalar_lea.vmem [#allocation7], %s302
        // Predicated region
        $region41: #{tpu_custom_call.1} parent=27 // pred_check
          %p304 = pneg %p108
        $region42: #{tpu_custom_call.1} parent=27 // pred_check_branch
          %306 = sbr.rel (%p304) target = $region44
        $region43: #{tpu_custom_call.1} parent=27 // pred_region
          %s308 = ssub.s32 128, 128
          %309 = vsyncadd %s300, %s308
          %s310 = smul.addr %s26, 128
          %s311 = scalar_lea.hbm %s2, %s310
          %s313 = sshll.u32 %s303, 4
          %s314 = int_to_ptr.vmem [resolvable:$true] %s313
          %316 = dma.vmem_to_hbm [thread:$0]  %s314, 128, %s311, %s300
        $region44: #{tpu_custom_call.1} parent=27 // pred_fallthru
          _
      $region28: #{tpu_custom_call.1} parent=5 // pred_fallthru
        _
      %p317 = scmp.le.s32.totalorder 2, %s17
      // Predicated region
      $region45: #{tpu_custom_call.1} parent=5 // pred_check
        %p318 = pneg %p317
      $region46: #{tpu_custom_call.1} parent=5 // pred_check_branch
        %320 = sbr.rel (%p318) target = $region48
      $region47: #{tpu_custom_call.1} parent=5 // pred_region
        %s321 = ssub.s32 %s17, 2
        // Predicated region
        $region49: #{tpu_custom_call.1} parent=47 // pred_check
          %p322 = pneg %p114
        $region50: #{tpu_custom_call.1} parent=47 // pred_check_branch
          %324 = sbr.rel (%p322) target = $region52
        $region51: #{tpu_custom_call.1} parent=47 // pred_region
          %s325 = sand.u32 %s99, 1
          %s326 = scalar_lea.sflag [#allocation4], %s325
          %s327 = sand.u32 %s99, 1
          %s328 = smul.addr %s327, 8
          %s329 = scalar_lea.vmem [#allocation7], %s328
          %330 = dma.done %s326, 128
        $region52: #{tpu_custom_call.1} parent=47 // pred_fallthru
          _
      $region48: #{tpu_custom_call.1} parent=5 // pred_fallthru
        _
    $region6: #{tpu_custom_call.1} parent=1 // loop_footer
      %s21 = sadd.s32 1, %s17
    $region7: #{tpu_custom_call.1} parent=1 // loop_footer_branch
      %16 = sbr.rel target = $region3
    $region8: #{tpu_custom_call.1} parent=1 // loop_exit
      _
    %331 = vsyncpa [#allocation3], 1
    %s332 = scalar_lea.sflag [#allocation3], 1
    %333 = vsyncpa %s332, 1
    %334 = vsyncpa [#allocation6], 1
    %s335 = scalar_lea.sflag [#allocation6], 1
    %336 = vsyncpa %s335, 1
    %337 = vsyncpa [#allocation4], 1
    %s338 = scalar_lea.sflag [#allocation4], 1
    %339 = vsyncpa %s338, 1

</llo_original>
